<compile_context>
chip_gen: v6e
topology: v6e:2x2x1
jax: 0.10.0
libtpu: 0.0.40
codegen_flags: <defaults>
</compile_context>

<pallas_src>
import jax
import jax.numpy as jnp
from jax.experimental import pallas as pl
from jax.experimental.pallas import tpu as pltpu

LANE = 128


def _drop_path_kernel(scale_ref, x_ref, o_ref):
    # scale_ref: (TB, 1, 1) f32, per-sample 0.0 or 1/keep_prob
    # x_ref / o_ref: (TB, TR, 128) tile
    # Multiply in f32, cast only on the store (free: kernel is HBM-bound).
    o_ref[...] = (x_ref[...].astype(jnp.float32) * scale_ref[...]).astype(o_ref.dtype)


def _chip_budget():
    """Return (target block bytes, vmem_limit_bytes) per TPU generation."""
    try:
        kind = jax.devices()[0].device_kind.lower()
    except Exception:
        kind = ""
    if "v5 lite" in kind or "v5e" in kind:
        # v5e: ~0.82 TB/s HBM, stay within the 16 MiB scoped-VMEM default.
        return 2 << 20, 16 << 20
    # v6e / v7x: higher HBM BW -> 4 MiB blocks; 32 MiB is the v7x scoped
    # default (half of its 64 MiB physical VMEM) and trivial for v6e.
    return 4 << 20, 32 << 20


def drop_path(x, drop_prob, training, key):
    """Functional drop_path matching the PyTorch reference."""
    if drop_prob is None or drop_prob == 0.0 or not training:
        return x
    if drop_prob >= 1.0:
        # keep_prob == 0: every sample dropped (reference would produce NaN/Inf).
        return jnp.zeros_like(x)
    if key is None:
        raise ValueError("drop_path requires an explicit PRNG key when active.")

    keep_prob = 1.0 - float(drop_prob)
    B = x.shape[0]
    x_flat = x.reshape(B, -1)
    N = x_flat.shape[1]

    # Per-sample binary mask -> per-sample scale (0.0 or 1/keep_prob), f32.
    u = jax.random.uniform(key, (B,), dtype=jnp.float32)
    scale = (jnp.floor(keep_prob + u) / keep_prob).reshape(B, 1, 1)

    itemsize = jnp.dtype(x.dtype).itemsize
    SUB = {4: 8, 2: 16, 1: 32}.get(itemsize, 8)   # sublane multiple per dtype

    # Lane-dense re-layout: pad only to the next lane multiple (<128 elems).
    # TODO(synk): handle the <128-element lane tail with an in-kernel masked
    # store instead of the wrapper pad/slice for the non-128-aligned-N case.
    R = pl.cdiv(N, LANE)
    N_pad = R * LANE
    if N_pad != N:
        x_flat = jnp.pad(x_flat, ((0, 0), (0, N_pad - N)))
    x3 = x_flat.reshape(B, R, LANE)

    target_block_bytes, vmem_limit = _chip_budget()
    rows_target = max(SUB, target_block_bytes // (LANE * itemsize))

    if R >= rows_target:
        # Big samples: tile the row axis, one sample per block.
        TB = 1
        TR = (rows_target // SUB) * SUB
    else:
        # Small samples: all rows of a sample per block, pack several samples
        # so each grid step still moves ~MiB of data.
        TR = R                                     # equals array dim -> legal
        TB = max(1, min(B, rows_target // max(R, 1)))

    # v7x has two TensorCores: try to expose >= 2 parallel blocks.
    if pl.cdiv(B, TB) * pl.cdiv(R, TR) < 2 and R >= 2 * SUB:
        TB = 1
        TR = pl.cdiv(pl.cdiv(R, 2), SUB) * SUB

    grid = (pl.cdiv(B, TB), pl.cdiv(R, TR))
    block_bytes = TB * TR * LANE * itemsize

    out3 = pl.pallas_call(
        _drop_path_kernel,
        out_shape=jax.ShapeDtypeStruct((B, R, LANE), x.dtype),
        grid=grid,
        in_specs=[
            pl.BlockSpec((TB, 1, 1), lambda bi, ri: (bi, 0, 0)),      # scale
            pl.BlockSpec((TB, TR, LANE), lambda bi, ri: (bi, ri, 0)),  # x
        ],
        out_specs=pl.BlockSpec((TB, TR, LANE), lambda bi, ri: (bi, ri, 0)),
        compiler_params=pltpu.CompilerParams(
            dimension_semantics=("parallel", "parallel"),
            # in+out double-buffered = 4*block; keep 2x headroom, cap per chip.
            vmem_limit_bytes=int(min(vmem_limit, max(8 * block_bytes, 4 << 20))),
        ),
        cost_estimate=pl.CostEstimate(
            flops=B * N,
            transcendentals=0,
            bytes_accessed=2 * B * N * itemsize + B * 4,
        ),
    )(scale, x3)

    out_flat = out3.reshape(B, N_pad)
    if N_pad != N:
        out_flat = out_flat[:, :N]
    return out_flat.reshape(x.shape)


class DropPath:
    """JAX/Pallas port of the PyTorch DropPath module."""

    def __init__(self, drop_prob=None):
        self.drop_prob = drop_prob

    def __call__(self, x, *, training=True, key=None):
        return drop_path(x, self.drop_prob, training, key)

    def extra_repr(self):
        return "p={}".format(self.drop_prob)


if __name__ == "__main__":
    key = jax.random.PRNGKey(0)
    kx, kd = jax.random.split(key)

    # small NCHW input, consistent with how DropPath is used inside SpatVit
    B, C, H, W = 2, 4, 16, 16
    x = jax.random.normal(kx, (B, C, H, W), dtype=jnp.float32)

    module = DropPath(drop_prob=0.25)

    # training path (stochastic depth active)
    y_train = jax.block_until_ready(module(x, training=True, key=kd))
    # eval path (identity)
    y_eval = jax.block_until_ready(module(x, training=False))

    # reference semantics (PyTorch: x.div(keep_prob) * mask)
    keep_prob = 1.0 - 0.25
    u = jax.random.uniform(kd, (B,), dtype=jnp.float32)
    mask = jnp.floor(keep_prob + u).reshape(B, 1, 1, 1)
    y_ref = x / keep_prob * mask
    assert jnp.allclose(y_train, y_ref, rtol=1e-5, atol=1e-6), "training path mismatch"
    assert jnp.allclose(y_eval, x), "eval path must be identity"

    # also exercise the non-lane-aligned (padded) path
    x2 = jax.random.normal(kx, (B, 3, 7, 5), dtype=jnp.float32)
    y2 = jax.block_until_ready(module(x2, training=True, key=kd))
    y2_ref = x2 / keep_prob * mask
    assert jnp.allclose(y2, y2_ref, rtol=1e-5, atol=1e-6), "padded path mismatch"

    # drop_prob == 1.0 guard: everything dropped, no NaN/Inf
    y3 = jax.block_until_ready(DropPath(drop_prob=1.0)(x, training=True, key=kd))
    assert jnp.all(y3 == 0.0), "drop_prob=1.0 must produce zeros"

    print("KERNEL_OK")
</pallas_src>

<mosaic_0001>
module attributes {stable_mosaic.version = 11 : i64} {
  func.func @_drop_path_kernel(%arg0: i32, %arg1: i32, %arg2: memref<2x1x1xf32, #tpu.memory_space<vmem>>, %arg3: memref<2x8x128xf32, #tpu.memory_space<vmem>>, %arg4: memref<2x8x128xf32, #tpu.memory_space<vmem>>) attributes {dimension_semantics = [#tpu.dimension_semantics<parallel>, #tpu.dimension_semantics<parallel>], iteration_bounds = array<i64: 1, 1>, scalar_prefetch = 0 : i64, scratch_operands = 0 : i64, tpu.core_type = #tpu.core_type<tc>, window_params = [{transform_indices = @transform_0, window_bounds = array<i64: 2, 1, 1>}, {transform_indices = @transform_1, window_bounds = array<i64: 2, 8, 128>}, {transform_indices = @transform_2, window_bounds = array<i64: 2, 8, 128>}]} {
    %c0 = arith.constant 0 : index
    %c0_0 = arith.constant 0 : index
    %c0_1 = arith.constant 0 : index
    %0 = vector.load %arg3[%c0, %c0_0, %c0_1] : memref<2x8x128xf32, #tpu.memory_space<vmem>>, vector<2x8x128xf32>
    %c0_2 = arith.constant 0 : index
    %c0_3 = arith.constant 0 : index
    %c0_4 = arith.constant 0 : index
    %1 = vector.load %arg2[%c0_2, %c0_3, %c0_4] : memref<2x1x1xf32, #tpu.memory_space<vmem>>, vector<2x1x1xf32>
    %2 = vector.broadcast %1 : vector<2x1x1xf32> to vector<2x8x128xf32>
    %3 = arith.mulf %0, %2 : vector<2x8x128xf32>
    %c0_5 = arith.constant 0 : index
    %c0_6 = arith.constant 0 : index
    %c0_7 = arith.constant 0 : index
    %4 = vector.load %arg4[%c0_5, %c0_6, %c0_7] : memref<2x8x128xf32, #tpu.memory_space<vmem>>, vector<2x8x128xf32>
    tpu.vector_store %arg4[%c0_5, %c0_6, %c0_7], %3 {strides = array<i32>} : memref<2x8x128xf32, #tpu.memory_space<vmem>>, vector<2x8x128xf32>,
    return
  }
  func.func @transform_0(%arg0: i32, %arg1: i32) -> (i32, i32, i32) {
    %c0_i32 = arith.constant 0 : i32
    %c0_i32_0 = arith.constant 0 : i32
    %c0_i32_1 = arith.constant 0 : i32
    return %arg0, %c0_i32, %c0_i32_0 : i32, i32, i32
  }
  func.func @transform_1(%arg0: i32, %arg1: i32) -> (i32, i32, i32) {
    %c0_i32 = arith.constant 0 : i32
    %c0_i32_0 = arith.constant 0 : i32
    return %arg0, %arg1, %c0_i32 : i32, i32, i32
  }
  func.func @transform_2(%arg0: i32, %arg1: i32) -> (i32, i32, i32) {
    %c0_i32 = arith.constant 0 : i32
    %c0_i32_0 = arith.constant 0 : i32
    return %arg0, %arg1, %c0_i32 : i32, i32, i32
  }
}

</mosaic_0001>

<llo_original>
// kernel: tpu_custom_call.1
$region0: #{tpu_custom_call.1}
  #allocation0 [shape = 'u32[]', space=smem, size = 0x4, offset = 0x4, fixed_abs, tag = 'smem constant byte address 0x4 - core index']
  #allocation1 [shape = 'u32[144,128]{1,0:T(1,128)}', space=vmem, size = 0x12000, scoped, tag = 'internal scratch']
  %s0 = inlined_call_operand.vmem [shape: f32[2,1,1], index: 0, kind: input, shape index: {}]
  %s1 = inlined_call_operand.hbm [shape: f32[2,8,128], index: 1, kind: input, shape index: {}]
  %s2 = inlined_call_operand.hbm [shape: f32[2,8,128], index: 2, kind: output, shape index: {}]
  %s3 = sld [smem:[#allocation0]]
  $region22: #{tpu_custom_call.1} parent=0
    _
  %s5 = ssub.s32 1, %s3
  %s6 = scalar_select 0, %s5, %s3
  $region1: #{tpu_custom_call.1} parent=0
    #allocation2 [shape = 'u8[8192]{0}', space=vmem, size = 0x2000, scoped, tag = 'input window, operand 1, single buffered']
    #allocation3 [shape = 's32[1]{0}', space=sflag, size = 0x4, scoped, tag = 'scoped memory for tpu_custom_call.1']
    #allocation4 [shape = 's32[1]{0}', space=sflag, size = 0x4, scoped, tag = 'scoped memory for tpu_custom_call.1']
    #allocation5 [shape = 'u8[8192]{0}', space=vmem, size = 0x2000, scoped, tag = 'output window, operand 0, single buffered']
    %7 = vsyncpa [#allocation3], 0
    %8 = vsyncpa [#allocation4], 0
    // Predicated region
    $region2: #{tpu_custom_call.1} parent=1 // pred_check
      _
    $region3: #{tpu_custom_call.1} parent=1 // pred_check_branch
      %10 = sbr.rel (0) target = $region5
    $region4: #{tpu_custom_call.1} parent=1 // pred_region
      _
    $region5: #{tpu_custom_call.1} parent=1 // pred_fallthru
      _
    // Predicated region
    $region6: #{tpu_custom_call.1} parent=1 // pred_check
      _
    $region7: #{tpu_custom_call.1} parent=1 // pred_check_branch
      %12 = sbr.rel (0) target = $region9
    $region8: #{tpu_custom_call.1} parent=1 // pred_region
      %s14 = ssub.s32 256, 256
      %15 = vsyncadd [#allocation3], %s14
      %s16 = sshll.u32 [#allocation2], 4
      %s17 = int_to_ptr.vmem [resolvable:$true] %s16
      %22 = dma.hbm_to_vmem [thread:$0]  %s1, 256, %s17, [#allocation3], 128, 128, 8
    $region9: #{tpu_custom_call.1} parent=1 // pred_fallthru
      _
    // Predicated region
    $region10: #{tpu_custom_call.1} parent=1 // pred_check
      _
    $region11: #{tpu_custom_call.1} parent=1 // pred_check_branch
      %24 = sbr.rel (0) target = $region13
    $region12: #{tpu_custom_call.1} parent=1 // pred_region
      %25 = dma.done [#allocation3], 256
    $region13: #{tpu_custom_call.1} parent=1 // pred_fallthru
      _
    %v26 = vld [vmem:[#allocation2] sm:$0xff]
    %v27 = vld [vmem:[#allocation2 + $0x8] sm:$0xff]
    %v28 = vld [vmem:[%s0] sm:$0x1]
    %v29 = vld [vmem:[%s0 + $0x1] sm:$0x1]
    %v32 = vlaneseq
    %v33 = vshrl.u32 %v32, 7
    %v34 = vsub.s32 0, %v33
    %v35 = vrot.slane %v28, %v34
    %v36 = vlaneseq
    %v37 = vshrl.u32 %v36, 7
    %v38 = vsub.s32 0, %v37
    %v39 = vrot.slane %v29, %v38
    %40 = vset.pattern.permute.xlu0 0
    %41 = vperm.xlu0 %40, %v35
    %v42 = vpop.permute.xlu0 %41
    %44 = vset.pattern.permute.xlu0 0
    %45 = vperm.xlu0 %44, %v39
    %v46 = vpop.permute.xlu0 %45
    %v48 = vmul.f32 %v26, %v42
    %v49 = vmul.f32 %v27, %v46
    %50 = vst [vmem:[#allocation5] sm:$0xff] %v48
    %51 = vst [vmem:[#allocation5 + $0x8] sm:$0xff] %v49
    // Predicated region
    $region14: #{tpu_custom_call.1} parent=1 // pred_check
      _
    $region15: #{tpu_custom_call.1} parent=1 // pred_check_branch
      %53 = sbr.rel (0) target = $region17
    $region16: #{tpu_custom_call.1} parent=1 // pred_region
      %s55 = ssub.s32 256, 256
      %56 = vsyncadd [#allocation4], %s55
      %s57 = sshll.u32 [#allocation5], 4
      %s58 = int_to_ptr.vmem [resolvable:$true] %s57
      %63 = dma.vmem_to_hbm [thread:$0]  %s58, 256, %s2, [#allocation4], 128, 128, 8
    $region17: #{tpu_custom_call.1} parent=1 // pred_fallthru
      _
    // Predicated region
    $region18: #{tpu_custom_call.1} parent=1 // pred_check
      _
    $region19: #{tpu_custom_call.1} parent=1 // pred_check_branch
      %65 = sbr.rel (0) target = $region21
    $region20: #{tpu_custom_call.1} parent=1 // pred_region
      %66 = dma.done [#allocation4], 256
    $region21: #{tpu_custom_call.1} parent=1 // pred_fallthru
      _
    %67 = vsyncpa [#allocation3], 1
    %68 = vsyncpa [#allocation4], 1

</llo_original>
